<compile_context>
chip_gen: v6e
topology: v6e:2x2x1
jax: 0.10.0
libtpu: 0.0.40
codegen_flags: <defaults>
</compile_context>

<pallas_src>
import numpy as np
import jax
import jax.numpy as jnp
from jax.experimental import pallas as pl
from jax.experimental.pallas import tpu as pltpu

_HALF_LOG_2PI = 0.5 * float(np.log(2.0 * np.pi))

# VMEM budget the batch tile is sized against.  v7x only has 64 MiB physical
# per TensorCore; 44 MiB of blocks + 4 MiB slack keeps every generation happy.
_VMEM_TILE_BUDGET = 44 * 1024 * 1024
_VMEM_LIMIT_BYTES = 48 * 1024 * 1024


def _pick_block_b(batch, feat, matmul_bytes, budget=_VMEM_TILE_BUDGET):
    """Largest batch tile that fits the VMEM budget (and feeds the MXU)."""
    # Resident, single-buffered operands: W (feat x feat) + f32 bias.
    fixed = feat * feat * matmul_bytes + feat * 4
    # Per-batch-row cost: double-buffered f32 eps tile, f32 y tile, stat col.
    per_row = 2 * feat * 4 + 2 * feat * 4 + 2 * 4
    cap = max((budget - fixed) // per_row, 8)
    bm = int(min(512, cap, batch))
    # Keep >= 2 grid steps so the v7x megacore can shard the batch axis.
    if bm >= batch and batch > 8:
        bm = -(-batch // 2)
    # Align to an MXU / sublane-friendly granule.
    align = 128 if bm >= 128 else 8
    bm = (bm // align) * align
    return max(min(bm, batch), min(batch, 8))


def _var_dequant_kernel(eps_ref, wt_ref, b_ref, logdet_ref, y_ref, stat_ref):
    eps = eps_ref[...]                        # (bm, F) f32
    wt = wt_ref[...]                          # (F, F)  (in, out) layout
    b = b_ref[...]                            # (1, F)  f32

    # z = eps @ W.T + b.  W was pre-transposed on the host, so this is the
    # natural (M,K)x(K,N) contraction; low-precision inputs, f32 accumulate.
    z = jax.lax.dot_general(
        eps.astype(wt.dtype), wt, (((1,), (0,)), ((), ())),
        preferred_element_type=jnp.float32) + b

    y = jax.nn.sigmoid(z)
    y_ref[...] = y.astype(y_ref.dtype)

    # log(y) + log(1-y) == z - 2*softplus(z) == -|z| - 2*log(1 + exp(-|z|))
    # (fewer EUP ops than log(y)+log(1-y), and no -inf when sigmoid saturates).
    az = jnp.abs(z)
    log_y_terms = -(az + 2.0 * jnp.log(1.0 + jnp.exp(-az)))

    # stat = F/2*log(2pi) + 0.5*sum(eps^2) + sum(log y + log(1-y)) + log|det W|
    # fused into a single axis=-1 reduction.
    per_elem = 0.5 * eps * eps + log_y_terms
    row = jnp.sum(per_elem, axis=1, keepdims=True)            # (bm, 1)
    const = jnp.float32(eps.shape[1] * _HALF_LOG_2PI)
    stat_ref[...] = (row + (const + logdet_ref[0])).astype(stat_ref.dtype)


def var_dequant_dense(X, weight, bias, key, *, block_b=None,
                      matmul_dtype=jnp.bfloat16):
    """Returns (y, -log_pdf_eps + jac, eps) exactly like the torch module."""
    B, F = X.shape

    # eps is fresh Gaussian noise with X's shape/dtype (torch.randn_like).
    # TODO(synk): eps could be generated in-kernel with pltpu.prng_* to save
    # one B*F*4-byte HBM read, but that changes the RNG stream vs jax.random.
    eps = jax.random.normal(key, X.shape, dtype=X.dtype)

    # TODO(synk): torch.slogdet (LU factorization) has no clean in-kernel
    # Pallas equivalent; the scalar log|det W| is computed in plain JAX and
    # fed to the kernel through SMEM.
    _, logabsdet = jnp.linalg.slogdet(weight.astype(jnp.float32))
    logdet = jnp.reshape(logabsdet, (1,)).astype(jnp.float32)

    # Pre-transpose (and pre-cast) the grid-invariant weight once on the host:
    # (out,in) -> (in,out) gives the kernel a natural MXU contraction, and
    # bf16 halves both the resident VMEM footprint and the W HBM traffic.
    wt = weight.T.astype(matmul_dtype)
    bias2d = bias.reshape(1, F).astype(jnp.float32)

    bm = block_b if block_b is not None else _pick_block_b(
        B, F, jnp.dtype(matmul_dtype).itemsize)
    grid = (pl.cdiv(B, bm),)

    y, stat = pl.pallas_call(
        _var_dequant_kernel,
        out_shape=(jax.ShapeDtypeStruct((B, F), jnp.float32),
                   jax.ShapeDtypeStruct((B, 1), jnp.float32)),
        grid=grid,
        in_specs=[
            pl.BlockSpec((bm, F), lambda i: (i, 0)),               # eps tile
            pl.BlockSpec((F, F), lambda i: (0, 0),
                         pipeline_mode=pl.Buffered(1)),            # W (resident)
            pl.BlockSpec((1, F), lambda i: (0, 0),
                         pipeline_mode=pl.Buffered(1)),            # bias
            pl.BlockSpec(memory_space=pltpu.SMEM),                 # log|det W|
        ],
        out_specs=(
            pl.BlockSpec((bm, F), lambda i: (i, 0)),               # y
            pl.BlockSpec((bm, 1), lambda i: (i, 0)),               # per-row stat
        ),
        compiler_params=pltpu.CompilerParams(
            dimension_semantics=("parallel",),
            vmem_limit_bytes=_VMEM_LIMIT_BYTES),
    )(eps, wt, bias2d, logdet)

    return y, stat.reshape(B), eps


if __name__ == "__main__":
    B, F = 16, 32
    key = jax.random.PRNGKey(0)
    kx, kw, kb, keps = jax.random.split(key, 4)

    # Deterministic nn.Linear-style init: uniform(-1/sqrt(F), 1/sqrt(F)).
    X = jax.random.normal(kx, (B, F), dtype=jnp.float32)
    bound = 1.0 / np.sqrt(F)
    weight = jax.random.uniform(kw, (F, F), minval=-bound, maxval=bound,
                                dtype=jnp.float32)
    bias = jax.random.uniform(kb, (F,), minval=-bound, maxval=bound,
                              dtype=jnp.float32)

    y, stat, eps = var_dequant_dense(X, weight, bias, keps)
    jax.block_until_ready((y, stat, eps))

    # Pure-JAX reference.  The matmul inputs are rounded to bf16 to mirror the
    # kernel's bf16-input / f32-accumulate MXU matmul; everything else is f32
    # and matches the torch module's math.
    eps_mm = eps.astype(jnp.bfloat16).astype(jnp.float32)
    w_mm = weight.astype(jnp.bfloat16).astype(jnp.float32)
    z_ref = eps_mm @ w_mm.T + bias
    y_ref = jax.nn.sigmoid(z_ref)
    _, ld = jnp.linalg.slogdet(weight)
    jac_ref = jnp.log(y_ref).sum(1) + jnp.log(1.0 - y_ref).sum(1) + ld
    log_pdf_ref = -F * 0.5 * np.log(2.0 * np.pi) - 0.5 * jnp.sum(eps ** 2, axis=1)
    stat_ref = -log_pdf_ref + jac_ref

    assert y.shape == (B, F) and stat.shape == (B,) and eps.shape == (B, F)
    assert jnp.allclose(y, y_ref, atol=2e-4, rtol=2e-4), "y mismatch"
    assert jnp.allclose(stat, stat_ref, atol=2e-3, rtol=2e-3), "stat mismatch"

    print("KERNEL_OK")
</pallas_src>

<mosaic_0001>
module attributes {stable_mosaic.version = 11 : i64} {
  func.func @_var_dequant_kernel(%arg0: i32, %arg1: memref<8x32xf32, #tpu.memory_space<vmem>>, %arg2: memref<32x32xbf16, #tpu.memory_space<vmem>>, %arg3: memref<1x32xf32, #tpu.memory_space<vmem>>, %arg4: memref<1xf32, #tpu.memory_space<smem>>, %arg5: memref<8x32xf32, #tpu.memory_space<vmem>>, %arg6: memref<8x1xf32, #tpu.memory_space<vmem>>) attributes {dimension_semantics = [#tpu.dimension_semantics<parallel>], iteration_bounds = array<i64: 2>, scalar_prefetch = 0 : i64, scratch_operands = 0 : i64, tpu.core_type = #tpu.core_type<tc>, window_params = [{transform_indices = @transform_0, window_bounds = array<i64: 8, 32>}, {pipeline_mode = #tpu.pipeline_mode<synchronous>, transform_indices = @transform_1, window_bounds = array<i64: 32, 32>}, {pipeline_mode = #tpu.pipeline_mode<synchronous>, transform_indices = @transform_2, window_bounds = array<i64: 1, 32>}, {transform_indices = @transform_3, window_bounds = array<i64: 1>}, {transform_indices = @transform_4, window_bounds = array<i64: 8, 32>}, {transform_indices = @transform_5, window_bounds = array<i64: 8, 1>}]} {
    %c0 = arith.constant 0 : index
    %c0_0 = arith.constant 0 : index
    %0 = vector.load %arg1[%c0, %c0_0] : memref<8x32xf32, #tpu.memory_space<vmem>>, vector<8x32xf32>
    %c0_1 = arith.constant 0 : index
    %c0_2 = arith.constant 0 : index
    %1 = vector.load %arg2[%c0_1, %c0_2] : memref<32x32xbf16, #tpu.memory_space<vmem>>, vector<32x32xbf16>
    %c0_3 = arith.constant 0 : index
    %c0_4 = arith.constant 0 : index
    %2 = vector.load %arg3[%c0_3, %c0_4] : memref<1x32xf32, #tpu.memory_space<vmem>>, vector<1x32xf32>
    %3 = arith.truncf %0 : vector<8x32xf32> to vector<8x32xbf16>
    %cst = arith.constant dense<0.000000e+00> : vector<8x32xf32>
    %4 = tpu.matmul %3, %1, %cst {dimension_numbers = #tpu.dot_dimension_numbers<[1], [0], [0], [1], [0, 0, 1, 1], [], []>} : vector<8x32xbf16>, vector<32x32xbf16>, vector<8x32xf32> -> vector<8x32xf32>
    %5 = vector.broadcast %2 : vector<1x32xf32> to vector<8x32xf32>
    %6 = arith.addf %4, %5 : vector<8x32xf32>
    %7 = arith.negf %6 : vector<8x32xf32>
    %8 = math.exp %7 : vector<8x32xf32>
    %cst_5 = arith.constant 1.000000e+00 : f32
    %9 = vector.broadcast %cst_5 : f32 to vector<8x32xf32>
    %10 = arith.addf %9, %8 : vector<8x32xf32>
    %11 = arith.divf %9, %10 : vector<8x32xf32>
    %c0_6 = arith.constant 0 : index
    %c0_7 = arith.constant 0 : index
    %12 = vector.load %arg5[%c0_6, %c0_7] : memref<8x32xf32, #tpu.memory_space<vmem>>, vector<8x32xf32>
    tpu.vector_store %arg5[%c0_6, %c0_7], %11 {strides = array<i32>} : memref<8x32xf32, #tpu.memory_space<vmem>>, vector<8x32xf32>,
    %13 = math.absf %6 : vector<8x32xf32>
    %cst_8 = arith.constant 0.000000e+00 : f32
    %14 = vector.broadcast %cst_8 : f32 to vector<8x32xf32>
    %15 = arith.subf %14, %13 : vector<8x32xf32>
    %16 = math.exp %15 : vector<8x32xf32>
    %cst_9 = arith.constant 1.000000e+00 : f32
    %17 = vector.broadcast %cst_9 : f32 to vector<8x32xf32>
    %18 = arith.addf %17, %16 : vector<8x32xf32>
    %19 = math.log %18 : vector<8x32xf32>
    %cst_10 = arith.constant 2.000000e+00 : f32
    %20 = vector.broadcast %cst_10 : f32 to vector<8x32xf32>
    %21 = arith.mulf %20, %19 : vector<8x32xf32>
    %22 = arith.addf %13, %21 : vector<8x32xf32>
    %cst_11 = arith.constant 0.000000e+00 : f32
    %23 = vector.broadcast %cst_11 : f32 to vector<8x32xf32>
    %24 = arith.subf %23, %22 : vector<8x32xf32>
    %cst_12 = arith.constant 5.000000e-01 : f32
    %25 = vector.broadcast %cst_12 : f32 to vector<8x32xf32>
    %26 = arith.mulf %25, %0 : vector<8x32xf32>
    %27 = arith.mulf %26, %0 : vector<8x32xf32>
    %28 = arith.addf %27, %24 : vector<8x32xf32>
    %cst_13 = arith.constant dense<0.000000e+00> : vector<8xf32>
    %29 = vector.multi_reduction <add>, %28, %cst_13 [1] : vector<8x32xf32> to vector<8xf32>
    %30 = vector.shape_cast %29 : vector<8xf32> to vector<8x1xf32>
    %c0_14 = arith.constant 0 : index
    %31 = memref.load %arg4[%c0_14] : memref<1xf32, #tpu.memory_space<smem>>
    %cst_15 = arith.constant 29.4060326 : f32
    %32 = arith.addf %cst_15, %31 : f32
    %33 = vector.broadcast %32 : f32 to vector<8x1xf32>
    %34 = arith.addf %30, %33 : vector<8x1xf32>
    %c0_16 = arith.constant 0 : index
    %c0_17 = arith.constant 0 : index
    %35 = vector.load %arg6[%c0_16, %c0_17] : memref<8x1xf32, #tpu.memory_space<vmem>>, vector<8x1xf32>
    tpu.vector_store %arg6[%c0_16, %c0_17], %34 {strides = array<i32>} : memref<8x1xf32, #tpu.memory_space<vmem>>, vector<8x1xf32>,
    return
  }
  func.func @transform_0(%arg0: i32) -> (i32, i32) {
    %c0_i32 = arith.constant 0 : i32
    %c0_i32_0 = arith.constant 0 : i32
    return %arg0, %c0_i32 : i32, i32
  }
  func.func @transform_1(%arg0: i32) -> (i32, i32) {
    %c0_i32 = arith.constant 0 : i32
    %c0_i32_0 = arith.constant 0 : i32
    %c0_i32_1 = arith.constant 0 : i32
    return %c0_i32, %c0_i32_0 : i32, i32
  }
  func.func @transform_2(%arg0: i32) -> (i32, i32) {
    %c0_i32 = arith.constant 0 : i32
    %c0_i32_0 = arith.constant 0 : i32
    %c0_i32_1 = arith.constant 0 : i32
    return %c0_i32, %c0_i32_0 : i32, i32
  }
  func.func @transform_3(%arg0: i32) -> i32 {
    %c0_i32 = arith.constant 0 : i32
    %c0_i32_0 = arith.constant 0 : i32
    return %c0_i32 : i32
  }
  func.func @transform_4(%arg0: i32) -> (i32, i32) {
    %c0_i32 = arith.constant 0 : i32
    %c0_i32_0 = arith.constant 0 : i32
    return %arg0, %c0_i32 : i32, i32
  }
  func.func @transform_5(%arg0: i32) -> (i32, i32) {
    %c0_i32 = arith.constant 0 : i32
    %c0_i32_0 = arith.constant 0 : i32
    return %arg0, %c0_i32 : i32, i32
  }
}

</mosaic_0001>

<llo_original>
// kernel: tpu_custom_call.1
$region0: #{tpu_custom_call.1}
  #allocation0 [shape = 'u32[]', space=smem, size = 0x4, offset = 0x4, fixed_abs, tag = 'smem constant byte address 0x4 - core index']
  #allocation1 [shape = 'u32[144,128]{1,0:T(1,128)}', space=vmem, size = 0x12000, scoped, tag = 'internal scratch']
  #allocation2 [shape = 'f32[1]{0:T(128)S(6)}', space=smem, size = 0x200, scoped, tag = 'scoped memory for tpu_custom_call.1']
  %s0 = inlined_call_operand.hbm [shape: f32[16,32], index: 0, kind: input, shape index: {}]
  %s1 = inlined_call_operand.hbm [shape: bf16[32,32], index: 1, kind: input, shape index: {}]
  %s2 = inlined_call_operand.vmem [shape: f32[1,32], index: 2, kind: input, shape index: {}]
  %s3 = inlined_call_operand.<no memory space> [shape: f32[1], index: 3, kind: input, shape index: {}]
  %s4 = inlined_call_operand.hbm [shape: f32[16,32], index: 4, kind: output, shape index: {0}]
  %s5 = inlined_call_operand.vmem [shape: f32[16,1], index: 5, kind: output, shape index: {1}]
  %6 = xla_tuple %s4, %s5
  %s7 = sld [smem:[#allocation0]]
  $region65: #{tpu_custom_call.1} parent=0
    _
  %s9 = ssub.s32 1, %s7
  %s10 = scalar_select 0, %s9, %s7
  %11 = sst [smem:[#allocation2]] %s3
  $region1: #{tpu_custom_call.1} parent=0
    #allocation3 [shape = 'u8[8192]{0}', space=vmem, size = 0x2000, scoped, tag = 'input window, operand 0']
    #allocation4 [shape = 's32[2]{0}', space=sflag, size = 0x8, scoped, tag = 'scoped memory for tpu_custom_call.1']
    #allocation5 [shape = 's32[2]{0}', space=sflag, size = 0x8, scoped, tag = 'scoped memory for tpu_custom_call.1']
    #allocation6 [shape = 'u8[8192]{0}', space=vmem, size = 0x2000, scoped, tag = 'input window, operand 1, single buffered']
    #allocation7 [shape = 's32[1]{0}', space=sflag, size = 0x4, scoped, tag = 'scoped memory for tpu_custom_call.1']
    #allocation8 [shape = 'u8[8192]{0}', space=vmem, size = 0x2000, scoped, tag = 'output window, operand 0']
    %12 = vsyncpa [#allocation4], 0
    %s13 = scalar_lea.sflag [#allocation4], 1
    %14 = vsyncpa %s13, 0
    %15 = vsyncpa [#allocation7], 0
    %16 = vsyncpa [#allocation5], 0
    %s17 = scalar_lea.sflag [#allocation5], 1
    %18 = vsyncpa %s17, 0
    loop: start=0, step=1, limit=4
    $region2: #{tpu_custom_call.1} parent=1 // loop_pre_header
      _
    $region3: #{tpu_custom_call.1} parent=1 // loop_header
      %s20 = sphi 0, %s24
      %p21 = scmp.ge.s32.totalorder %s20, 4
      %s30 = sphi 0, %s32
      %s33 = sphi 0, %s30
      %s34 = sphi 0, %s33
      %s50 = sphi 0, %s34
      %s54 = sphi 0, %s54
      %s56 = sphi 0, %s54
      %s57 = sphi 0, %s56
      %s71 = sphi 0, %s57
      %s75 = sphi 0, %s75
      %s77 = sphi 0, %s75
      %s78 = sphi 0, %s77
      %s92 = sphi 0, %s78
      %s96 = sphi 0, %s96
      %s98 = sphi 0, %s96
      %s99 = sphi 0, %s98
      %s113 = sphi 0, %s99
      %s119 = sphi 0, %s121
      %s122 = sphi 0, %s119
      %s123 = sphi 0, %s122
      %s139 = sphi 0, %s123
      %s145 = sphi 0, %s147
      %s148 = sphi 0, %s145
      %s149 = sphi 0, %s148
      %s165 = sphi 0, %s149
    $region4: #{tpu_custom_call.1} parent=1 // loop_header_branch
      %23 = sbr.rel (%p21) target = $region8
    $region5: #{tpu_custom_call.1} parent=1 // loop_body
      %s25 = ssub.s32 %s20, 1
      %s26 = ssub.s32 %s20, 2
      %s27 = sadd.s32 %s20, 1
      %s28 = ssub.s32 %s20, %s27
      %p29 = scmp.eq.s32.totalorder %s28, 0
      %s31 = sadd.s32 %s30, 1
      %s32 = scalar_select %p29, %s30, %s31
      %p35 = pneg %p29
      %p36 = scmp.eq.s32.totalorder %s20, 1
      %p37 = por %p35, %p36
      %p38 = scmp.ne.s32.totalorder %s30, %s33
      %p39 = scmp.eq.s32.totalorder %s20, 0
      %p40 = por %p38, %p39
      %p41 = scmp.ne.s32.totalorder %s30, %s33
      %p42 = scmp.eq.s32.totalorder %s25, 1
      %p43 = por %p41, %p42
      %p44 = scmp.ne.s32.totalorder %s33, %s34
      %p45 = scmp.eq.s32.totalorder %s25, 0
      %p46 = por %p44, %p45
      %p47 = scmp.ne.s32.totalorder %s33, %s34
      %p48 = scmp.eq.s32.totalorder %s26, 1
      %p49 = por %p47, %p48
      %p51 = scmp.ne.s32.totalorder %s34, %s50
      %p52 = scmp.eq.s32.totalorder %s26, 0
      %p53 = por %p51, %p52
      %s55 = sadd.s32 %s54, 1
      %p58 = scmp.eq.s32.totalorder %s20, 1
      %p59 = scmp.ne.s32.totalorder %s54, %s56
      %p60 = scmp.eq.s32.totalorder %s20, 0
      %p61 = por %p59, %p60
      %p62 = scmp.ne.s32.totalorder %s54, %s56
      %p63 = scmp.eq.s32.totalorder %s25, 1
      %p64 = por %p62, %p63
      %p65 = scmp.ne.s32.totalorder %s56, %s57
      %p66 = scmp.eq.s32.totalorder %s25, 0
      %p67 = por %p65, %p66
      %p68 = scmp.ne.s32.totalorder %s56, %s57
      %p69 = scmp.eq.s32.totalorder %s26, 1
      %p70 = por %p68, %p69
      %p72 = scmp.ne.s32.totalorder %s57, %s71
      %p73 = scmp.eq.s32.totalorder %s26, 0
      %p74 = por %p72, %p73
      %s76 = sadd.s32 %s75, 1
      %p79 = scmp.eq.s32.totalorder %s20, 1
      %p80 = scmp.ne.s32.totalorder %s75, %s77
      %p81 = scmp.eq.s32.totalorder %s20, 0
      %p82 = por %p80, %p81
      %p83 = scmp.ne.s32.totalorder %s75, %s77
      %p84 = scmp.eq.s32.totalorder %s25, 1
      %p85 = por %p83, %p84
      %p86 = scmp.ne.s32.totalorder %s77, %s78
      %p87 = scmp.eq.s32.totalorder %s25, 0
      %p88 = por %p86, %p87
      %p89 = scmp.ne.s32.totalorder %s77, %s78
      %p90 = scmp.eq.s32.totalorder %s26, 1
      %p91 = por %p89, %p90
      %p93 = scmp.ne.s32.totalorder %s78, %s92
      %p94 = scmp.eq.s32.totalorder %s26, 0
      %p95 = por %p93, %p94
      %s97 = sadd.s32 %s96, 1
      %p100 = scmp.eq.s32.totalorder %s20, 1
      %p101 = scmp.ne.s32.totalorder %s96, %s98
      %p102 = scmp.eq.s32.totalorder %s20, 0
      %p103 = por %p101, %p102
      %p104 = scmp.ne.s32.totalorder %s96, %s98
      %p105 = scmp.eq.s32.totalorder %s25, 1
      %p106 = por %p104, %p105
      %p107 = scmp.ne.s32.totalorder %s98, %s99
      %p108 = scmp.eq.s32.totalorder %s25, 0
      %p109 = por %p107, %p108
      %p110 = scmp.ne.s32.totalorder %s98, %s99
      %p111 = scmp.eq.s32.totalorder %s26, 1
      %p112 = por %p110, %p111
      %p114 = scmp.ne.s32.totalorder %s99, %s113
      %p115 = scmp.eq.s32.totalorder %s26, 0
      %p116 = por %p114, %p115
      %s117 = ssub.s32 %s20, %s27
      %p118 = scmp.eq.s32.totalorder %s117, 0
      %s120 = sadd.s32 %s119, 1
      %s121 = scalar_select %p118, %s119, %s120
      %p124 = pneg %p118
      %p125 = scmp.eq.s32.totalorder %s20, 1
      %p126 = por %p124, %p125
      %p127 = scmp.ne.s32.totalorder %s119, %s122
      %p128 = scmp.eq.s32.totalorder %s20, 0
      %p129 = por %p127, %p128
      %p130 = scmp.ne.s32.totalorder %s119, %s122
      %p131 = scmp.eq.s32.totalorder %s25, 1
      %p132 = por %p130, %p131
      %p133 = scmp.ne.s32.totalorder %s122, %s123
      %p134 = scmp.eq.s32.totalorder %s25, 0
      %p135 = por %p133, %p134
      %p136 = scmp.ne.s32.totalorder %s122, %s123
      %p137 = scmp.eq.s32.totalorder %s26, 1
      %p138 = por %p136, %p137
      %p140 = scmp.ne.s32.totalorder %s123, %s139
      %p141 = scmp.eq.s32.totalorder %s26, 0
      %p142 = por %p140, %p141
      %s143 = ssub.s32 %s20, %s27
      %p144 = scmp.eq.s32.totalorder %s143, 0
      %s146 = sadd.s32 %s145, 1
      %s147 = scalar_select %p144, %s145, %s146
      %p150 = pneg %p144
      %p151 = scmp.eq.s32.totalorder %s20, 1
      %p152 = por %p150, %p151
      %p153 = scmp.ne.s32.totalorder %s145, %s148
      %p154 = scmp.eq.s32.totalorder %s20, 0
      %p155 = por %p153, %p154
      %p156 = scmp.ne.s32.totalorder %s145, %s148
      %p157 = scmp.eq.s32.totalorder %s25, 1
      %p158 = por %p156, %p157
      %p159 = scmp.ne.s32.totalorder %s148, %s149
      %p160 = scmp.eq.s32.totalorder %s25, 0
      %p161 = por %p159, %p160
      %p162 = scmp.ne.s32.totalorder %s148, %s149
      %p163 = scmp.eq.s32.totalorder %s26, 1
      %p164 = por %p162, %p163
      %p166 = scmp.ne.s32.totalorder %s149, %s165
      %p167 = scmp.eq.s32.totalorder %s26, 0
      %p168 = por %p166, %p167
      %p169 = scmp.le.s32.totalorder 1, %s20
      %p170 = scmp.lt.s32.totalorder %s20, 3
      %p171 = pnand %p169, %p170
      %p172 = pneg %p171
      // Predicated region
      $region9: #{tpu_custom_call.1} parent=5 // pred_check
        _
      $region10: #{tpu_custom_call.1} parent=5 // pred_check_branch
        %174 = sbr.rel (%p171) target = $region12
      $region11: #{tpu_custom_call.1} parent=5 // pred_region
        %s175 = ssub.s32 %s20, 1
        // Predicated region
        $region13: #{tpu_custom_call.1} parent=11 // pred_check
          %p176 = pneg %p67
        $region14: #{tpu_custom_call.1} parent=11 // pred_check_branch
          %178 = sbr.rel (%p176) target = $region16
        $region15: #{tpu_custom_call.1} parent=11 // pred_region
          %s180 = ssub.s32 256, 256
          %181 = vsyncadd [#allocation7], %s180
          %s182 = sshll.u32 [#allocation6], 4
          %s183 = int_to_ptr.vmem [resolvable:$true] %s182
          %188 = dma.hbm_to_vmem [thread:$0]  %s1, 256, %s183, [#allocation7], 64, 64, 4
        $region16: #{tpu_custom_call.1} parent=11 // pred_fallthru
          _
        // Predicated region
        $region17: #{tpu_custom_call.1} parent=11 // pred_check
          %p189 = pneg %p88
        $region18: #{tpu_custom_call.1} parent=11 // pred_check_branch
          %191 = sbr.rel (%p189) target = $region20
        $region19: #{tpu_custom_call.1} parent=11 // pred_region
          _
        $region20: #{tpu_custom_call.1} parent=11 // pred_fallthru
          _
        // Predicated region
        $region21: #{tpu_custom_call.1} parent=11 // pred_check
          %p192 = pneg %p109
        $region22: #{tpu_custom_call.1} parent=11 // pred_check_branch
          %194 = sbr.rel (%p192) target = $region24
        $region23: #{tpu_custom_call.1} parent=11 // pred_region
          _
        $region24: #{tpu_custom_call.1} parent=11 // pred_fallthru
          _
      $region12: #{tpu_custom_call.1} parent=5 // pred_fallthru
        _
      %p195 = scmp.lt.s32.totalorder %s20, 2
      // Predicated region
      $region25: #{tpu_custom_call.1} parent=5 // pred_check
        %p196 = pneg %p195
      $region26: #{tpu_custom_call.1} parent=5 // pred_check_branch
        %198 = sbr.rel (%p196) target = $region28
      $region27: #{tpu_custom_call.1} parent=5 // pred_region
        // Predicated region
        $region29: #{tpu_custom_call.1} parent=27 // pred_check
          %p199 = pneg %p40
        $region30: #{tpu_custom_call.1} parent=27 // pred_check_branch
          %201 = sbr.rel (%p199) target = $region32
        $region31: #{tpu_custom_call.1} parent=27 // pred_region
          %s202 = sand.u32 %s30, 1
          %s203 = scalar_lea.sflag [#allocation4], %s202
          %s204 = sand.u32 %s30, 1
          %s205 = smul.addr %s204, 8
          %s206 = scalar_lea.vmem [#allocation3], %s205
          %s208 = ssub.s32 128, 128
          %209 = vsyncadd %s203, %s208
          %s210 = smul.addr %s20, 128
          %s211 = scalar_lea.hbm %s0, %s210
          %s213 = sshll.u32 %s206, 4
          %s214 = int_to_ptr.vmem [resolvable:$true] %s213
          %216 = dma.hbm_to_vmem [thread:$0]  %s211, 128, %s214, %s203
        $region32: #{tpu_custom_call.1} parent=27 // pred_fallthru
          _
      $region28: #{tpu_custom_call.1} parent=5 // pred_fallthru
        _
      %p217 = scmp.le.s32.totalorder 1, %s20
      %p218 = scmp.lt.s32.totalorder %s20, 3
      %p219 = pnand %p217, %p218
      %p220 = pneg %p219
      // Predicated region
      $region33: #{tpu_custom_call.1} parent=5 // pred_check
        _
      $region34: #{tpu_custom_call.1} parent=5 // pred_check_branch
        %222 = sbr.rel (%p219) target = $region36
      $region35: #{tpu_custom_call.1} parent=5 // pred_region
        %s223 = ssub.s32 %s20, 1
        %s224 = sand.u32 %s33, 1
        %s225 = scalar_lea.sflag [#allocation4], %s224
        %s226 = sand.u32 %s33, 1
        %s227 = smul.addr %s226, 8
        %s228 = scalar_lea.vmem [#allocation3], %s227
        // Predicated region
        $region37: #{tpu_custom_call.1} parent=35 // pred_check
          %p229 = pneg %p46
        $region38: #{tpu_custom_call.1} parent=35 // pred_check_branch
          %231 = sbr.rel (%p229) target = $region40
        $region39: #{tpu_custom_call.1} parent=35 // pred_region
          %232 = dma.done %s225, 128
        $region40: #{tpu_custom_call.1} parent=35 // pred_fallthru
          _
        // Predicated region
        $region41: #{tpu_custom_call.1} parent=35 // pred_check
          %p233 = pneg %p67
        $region42: #{tpu_custom_call.1} parent=35 // pred_check_branch
          %235 = sbr.rel (%p233) target = $region44
        $region43: #{tpu_custom_call.1} parent=35 // pred_region
          %236 = dma.done [#allocation7], 256
        $region44: #{tpu_custom_call.1} parent=35 // pred_fallthru
          _
        %s237 = sand.u32 %s33, 1
        %s238 = scalar_lea.sflag [#allocation4], %s237
        %s239 = sand.u32 %s33, 1
        %s240 = smul.addr %s239, 8
        %s241 = scalar_lea.vmem [#allocation3], %s240
        %p242 = pneg %p46
        %p243 = pneg %p43
        %p244 = pneg %p67
        %p245 = pneg %p64
        %p246 = pneg %p88
        %p247 = pneg %p85
        %p248 = pneg %p109
        %p249 = pneg %p106
        %p250 = pneg %p135
        %p251 = pneg %p132
        %s252 = sand.u32 %s122, 1
        %s253 = scalar_lea.sflag [#allocation5], %s252
        %s254 = sand.u32 %s122, 1
        %s255 = smul.addr %s254, 8
        %s256 = scalar_lea.vmem [#allocation8], %s255
        %p257 = pneg %p161
        %p258 = pneg %p158
        %p259 = scmp.lt.s32.totalorder %s25, 1
        %s260 = scalar_select %p259, %s25, 1
        %s261 = smul.addr %s260, 8
        %s262 = scalar_lea.vmem %s5, %s261
        %p263 = scmp.lt.s32.totalorder %s25, 1
        %s264 = scalar_select %p263, %s25, 1
        %s265 = smul.addr %s264, 8
        %s266 = scalar_lea.vmem %s5, %s265
        %v268 = vld [vmem:[%s228] sm:$0xff]
        %v269 = vld [vmem:[#allocation6] sm:$0xf]
        %v270 = vld [vmem:[#allocation6 + $0x4] sm:$0xf]
        %v271 = vld [vmem:[#allocation6 + $0x8] sm:$0xf]
        %v272 = vld [vmem:[#allocation6 + $0xc] sm:$0xf]
        %v273 = vld [vmem:[%s2] sm:$0x1]
        %v274 = vpack.c.bf16 %v268, %v268
        %v276 = vlaneseq
        %v277 = vshrl.u32 %v276, 7
        %v278 = vsub.s32 0, %v277
        %v279 = vrot.slane %v273, %v278
        %v285 = vunpack.c.l.b16 %v269
        %v286 = vunpack.c.l.b16 %v270
        %v287 = vunpack.c.l.b16 %v271
        %v288 = vunpack.c.l.b16 %v272
        %v289 = vpack.c.b16 %v286, %v285
        %v290 = vpack.c.b16 %v288, %v287
        %vm293 = vcmask 261120
        %v295 = vsel %vm293, %v274, 0
        %297 = vmatprep.subr.bf16.mxu0 0
        %298 = vmatpush1.bf16.msra.mxu0 0
        %299 = vmatprep.subr.bf16.mxu0 0
        %300 = vmatpush1.bf16.msra.mxu0 0
        %301 = vmatprep.subr.bf16.mxu0 0
        %302 = vmatpush1.bf16.msra.mxu0 0
        %303 = vmatprep.subr.bf16.mxu0 0
        %304 = vmatpush1.bf16.msra.mxu0 0
        %305 = vmatprep.subr.bf16.mxu0 0
        %306 = vmatpush1.bf16.msra.mxu0 0
        %307 = vmatprep.subr.bf16.mxu0 0
        %308 = vmatpush1.bf16.msra.mxu0 0
        %309 = vmatprep.subr.bf16.mxu0 0
        %310 = vmatpush1.bf16.msra.mxu0 %v290
        %311 = vmatprep.subr.bf16.mxu0 0
        %312 = vmatpush1.bf16.msra.mxu0 %v289
        %313 = vmatprep.subr.bf16.mxu0 0
        %314 = vmatpush2.bf16.msra.mxu0 0
        %315 = vmatprep.subr.bf16.mxu0 0
        %316 = vmatpush2.bf16.msra.mxu0 0
        %317 = vmatprep.subr.bf16.mxu0 0
        %318 = vmatpush2.bf16.msra.mxu0 0
        %319 = vmatprep.subr.bf16.mxu0 0
        %320 = vmatpush2.bf16.msra.mxu0 0
        %321 = vmatprep.subr.bf16.mxu0 0
        %322 = vmatpush2.bf16.msra.mxu0 0
        %323 = vmatprep.subr.bf16.mxu0 0
        %324 = vmatpush2.bf16.msra.mxu0 0
        %325 = vmatprep.subr.bf16.mxu0 0
        %326 = vmatpush2.bf16.msra.mxu0 0
        %327 = vmatprep.subr.bf16.mxu0 0
        %328 = vmatpush2.bf16.msra.mxu0 0
        %329 = vmatprep.mubr.bf16.mxu0 0
        %330 = vmatmul.mubr.bf16.gmra.mxu0 %v295
        %v331 = vpop.f32.mrf.mxu0
        %v332 = vadd.f32 %v279, %v331
        %v333 = vpop.f32.mrf.mxu0
        %v334 = vpop.f32.mrf.mxu0
        %v335 = vpop.f32.mrf.mxu0
        %336 = vdwg.mxu0
        %v337 = vxor.u32 %v332, 2147483648
        %v338 = vmul.f32 %v337, 1.442695
        %v339 = vpow.pop %v338
        %v340 = vadd.f32 %v339, 1.0
        %v341 = vrcp.pop %v340
        %v342 = vmul.f32 1.0, %v341
        %343 = vst.msk [vmem:[%s256] sm:$0xff] %vm293, %v342
        %v344 = vand.u32 2147483647, %v332
        %v345 = vsub.f32 0.0, %v344
        %v346 = vmul.f32 %v345, 1.442695
        %v347 = vpow.pop %v346
        %v348 = vadd.f32 %v347, 1.0
        %v349 = vlog2.pop %v348
        %v350 = vmul.f32 %v349, 0.6931472
        %v351 = vmul.f32 %v350, 2.0
        %v352 = vadd.f32 %v344, %v351
        %v353 = vsub.f32 0.0, %v352
        %v354 = vmul.f32 %v268, 0.5
        %v355 = vmul.f32 %v354, %v268
        %v356 = vadd.f32 %v355, %v353
        %v357 = vsel %vm293, %v356, 0.0
        %358 = vadd.xlane.f32.xlu0 %v357
        %v359 = vpop.xlane.xlu0 %358
        %s360 = sld [smem:[#allocation2]]
        %s361 = sadd.f32 %s360, 29.406033
        %v362 = vstv %s361
        %v363 = vadd.f32 %v359, %v362
        %vm364 = vcmask 7168
        %365 = vst.msk [vmem:[%s266] sm:$0xff] %vm364, %v363
        %s366 = sand.u32 %s122, 1
        %s367 = scalar_lea.sflag [#allocation5], %s366
        %s368 = sand.u32 %s122, 1
        %s369 = smul.addr %s368, 8
        %s370 = scalar_lea.vmem [#allocation8], %s369
        %p371 = scmp.lt.s32.totalorder %s25, 1
        %s372 = scalar_select %p371, %s25, 1
        %s373 = smul.addr %s372, 8
        %s374 = scalar_lea.vmem %s5, %s373
        // Predicated region
        $region45: #{tpu_custom_call.1} parent=35 // pred_check
          %p375 = pneg %p132
        $region46: #{tpu_custom_call.1} parent=35 // pred_check_branch
          %377 = sbr.rel (%p375) target = $region48
        $region47: #{tpu_custom_call.1} parent=35 // pred_region
          %s379 = ssub.s32 128, 128
          %380 = vsyncadd %s367, %s379
          %s381 = smul.addr %s25, 128
          %s382 = scalar_lea.hbm %s4, %s381
          %s384 = sshll.u32 %s370, 4
          %s385 = int_to_ptr.vmem [resolvable:$true] %s384
          %387 = dma.vmem_to_hbm [thread:$0]  %s385, 128, %s382, %s367
        $region48: #{tpu_custom_call.1} parent=35 // pred_fallthru
          _
        // Predicated region
        $region49: #{tpu_custom_call.1} parent=35 // pred_check
          %p388 = pneg %p158
        $region50: #{tpu_custom_call.1} parent=35 // pred_check_branch
          %390 = sbr.rel (%p388) target = $region52
        $region51: #{tpu_custom_call.1} parent=35 // pred_region
          _
        $region52: #{tpu_custom_call.1} parent=35 // pred_fallthru
          _
      $region36: #{tpu_custom_call.1} parent=5 // pred_fallthru
        _
      %p391 = scmp.le.s32.totalorder 2, %s20
      // Predicated region
      $region53: #{tpu_custom_call.1} parent=5 // pred_check
        %p392 = pneg %p391
      $region54: #{tpu_custom_call.1} parent=5 // pred_check_branch
        %394 = sbr.rel (%p392) target = $region56
      $region55: #{tpu_custom_call.1} parent=5 // pred_region
        %s395 = ssub.s32 %s20, 2
        // Predicated region
        $region57: #{tpu_custom_call.1} parent=55 // pred_check
          %p396 = pneg %p138
        $region58: #{tpu_custom_call.1} parent=55 // pred_check_branch
          %398 = sbr.rel (%p396) target = $region60
        $region59: #{tpu_custom_call.1} parent=55 // pred_region
          %s399 = sand.u32 %s123, 1
          %s400 = scalar_lea.sflag [#allocation5], %s399
          %s401 = sand.u32 %s123, 1
          %s402 = smul.addr %s401, 8
          %s403 = scalar_lea.vmem [#allocation8], %s402
          %404 = dma.done %s400, 128
        $region60: #{tpu_custom_call.1} parent=55 // pred_fallthru
          _
        // Predicated region
        $region61: #{tpu_custom_call.1} parent=55 // pred_check
          %p405 = pneg %p164
        $region62: #{tpu_custom_call.1} parent=55 // pred_check_branch
          %407 = sbr.rel (%p405) target = $region64
        $region63: #{tpu_custom_call.1} parent=55 // pred_region
          %p408 = scmp.lt.s32.totalorder %s26, 1
          %s409 = scalar_select %p408, %s26, 1
          %s410 = smul.addr %s409, 8
          %s411 = scalar_lea.vmem %s5, %s410
        $region64: #{tpu_custom_call.1} parent=55 // pred_fallthru
          _
      $region56: #{tpu_custom_call.1} parent=5 // pred_fallthru
        _
    $region6: #{tpu_custom_call.1} parent=1 // loop_footer
      %s24 = sadd.s32 1, %s20
    $region7: #{tpu_custom_call.1} parent=1 // loop_footer_branch
      %19 = sbr.rel target = $region3
    $region8: #{tpu_custom_call.1} parent=1 // loop_exit
      _
    %412 = vsyncpa [#allocation4], 1
    %s413 = scalar_lea.sflag [#allocation4], 1
    %414 = vsyncpa %s413, 1
    %415 = vsyncpa [#allocation7], 1
    %416 = vsyncpa [#allocation5], 1
    %s417 = scalar_lea.sflag [#allocation5], 1
    %418 = vsyncpa %s417, 1

</llo_original>
